<compile_context>
chip_gen: v7x
topology: tpu7x:2x2x1
jax: 0.10.0
libtpu: 0.0.40
codegen_flags: <defaults>
</compile_context>

<pallas_src>
import functools

import jax
import jax.numpy as jnp
from jax.experimental import pallas as pl
from jax.experimental.pallas import tpu as pltpu


def _vmem_physical_bytes() -> int:
    """Physical VMEM of the current TPU generation (conservative fallback if unknown)."""
    try:
        return int(pltpu.get_tpu_info().vmem_capacity_bytes)
    except Exception:
        return 64 << 20  # v7x is the smallest (64 MiB); assume it when we cannot query.


def _round_down(x: int, m: int) -> int:
    return max((x // m) * m, m)


def prepare_scaleup_weight(e, compute_dtype=None):
    """(O, C, P) conv weight -> (P*C, O) matmul weight with w[k*C + c, o] = e[o, c, k].

    Tiny; call once at parameter-init time for serving loops (constant-folds under jit
    for static weights).  compute_dtype=jnp.bfloat16 opts into bf16 MXU inputs.
    """
    O, C, P = e.shape
    w = jnp.transpose(e, (2, 1, 0)).reshape(P * C, O)
    if compute_dtype is not None:
        w = w.astype(compute_dtype)
    return w


def _make_matmul_kernel(compute_dtype):
    def kernel(x_ref, w_ref, o_ref):
        xv = x_ref[...]
        if xv.dtype != compute_dtype:
            # In-kernel cast: rides the otherwise-idle VPU slot instead of costing a
            # separate wrapper-side HBM read+write pass over x.
            xv = xv.astype(compute_dtype)
        o_ref[...] = jnp.dot(
            xv, w_ref[...], preferred_element_type=jnp.float32
        ).astype(o_ref.dtype)

    return kernel


@functools.partial(jax.jit, static_argnames=("patch_size",))
def scaleup_embedding_prepared(x, w, patch_size):
    """x: (B, L, C), w: (P*C, O) from prepare_scaleup_weight -> (B, L // P, O), x.dtype."""
    B, L, C = x.shape
    K, O = w.shape
    P = patch_size
    assert L % P == 0, "seq_len must be divisible by patch_size"
    assert K == P * C, "prepared weight does not match (patch_size, input_dim)"
    Lp = L // P
    M = B * Lp

    # Pure view: (B, L, C) -> (M, K) is layout-compatible, so this is a bitcast under jit.
    x_flat = x.reshape(M, K)

    x_bytes = x.dtype.itemsize
    w_bytes = w.dtype.itemsize
    o_bytes = x.dtype.itemsize
    compute_dtype = w.dtype  # bf16 iff the caller prepared the weight in bf16

    # --- generation-aware VMEM budgeting ------------------------------------------------
    vmem_cap = _vmem_physical_bytes()
    budget = max(vmem_cap // 3, 16 << 20)

    w_vmem = 2 * K * O * w_bytes  # count double buffers conservatively
    weight_resident = w_vmem <= budget // 2

    if weight_resident:
        # 1-D grid over M; the (K, O) weight block index is constant -> DMA'd once.
        # Very large K is handled by shrinking TM (no K-reduction axis needed here).
        per_row = 2 * (K * x_bytes + O * o_bytes)  # double-buffered x + out rows
        tm_max = max((budget - w_vmem) // per_row, 16)
        TM = min(M, tm_max, 8192)
        if TM < M:
            TM = _round_down(TM, 16)
        grid = (pl.cdiv(M, TM),)
        in_specs = [
            pl.BlockSpec((TM, K), lambda i: (i, 0)),
            pl.BlockSpec((K, O), lambda i: (0, 0)),  # resident: constant block index
        ]
        out_specs = pl.BlockSpec((TM, O), lambda i: (i, 0))
        dim_sem = ("parallel",)
        needed = w_vmem + per_row * TM
        x_passes = 1
    else:
        # Weight too large to keep resident: tile N with N as the OUTER (slow) axis so the
        # weight block changes once per N tile, not once per grid step.
        if O <= 128:
            TN = O
        else:
            TN = min(max((budget // 2) // (2 * K * w_bytes), 128), O)
            TN = _round_down(TN, 128)
        per_row = 2 * (K * x_bytes + TN * o_bytes)
        tm_max = max((budget - 2 * K * TN * w_bytes) // per_row, 16)
        TM = min(M, tm_max, 8192)
        if TM < M:
            TM = _round_down(TM, 16)
        grid = (pl.cdiv(O, TN), pl.cdiv(M, TM))  # (n outer/slow, m inner/fast)
        in_specs = [
            pl.BlockSpec((TM, K), lambda j, i: (i, 0)),
            pl.BlockSpec((K, TN), lambda j, i: (0, j)),
        ]
        out_specs = pl.BlockSpec((TM, TN), lambda j, i: (i, j))
        dim_sem = ("parallel", "parallel")
        needed = 2 * K * TN * w_bytes + per_row * TM
        x_passes = pl.cdiv(O, TN)

    vmem_limit = int(min(vmem_cap - (4 << 20), max(needed + (8 << 20), 24 << 20)))

    cost = pl.CostEstimate(
        flops=2 * M * K * O,
        transcendentals=0,
        bytes_accessed=x_passes * M * K * x_bytes + K * O * w_bytes + M * O * o_bytes,
    )

    out_flat = pl.pallas_call(
        _make_matmul_kernel(compute_dtype),
        out_shape=jax.ShapeDtypeStruct((M, O), x.dtype),
        grid_spec=pltpu.PrefetchScalarGridSpec(
            num_scalar_prefetch=0,
            grid=grid,
            in_specs=in_specs,
            out_specs=out_specs,
        ),
        compiler_params=pltpu.CompilerParams(
            dimension_semantics=dim_sem,
            vmem_limit_bytes=vmem_limit,
        ),
        cost_estimate=cost,
    )(x_flat, w)

    return out_flat.reshape(B, Lp, O)


def scaleup_embedding(x, e, patch_size, compute_dtype=None):
    """Convenience wrapper matching the PyTorch module's forward.

    compute_dtype=None keeps operands in their own dtype (PyTorch-equivalent numerics);
    pass jnp.bfloat16 to opt into bf16 MXU inputs (f32 accumulation).  For serving,
    hoist prepare_scaleup_weight(...) to init time and call scaleup_embedding_prepared.
    """
    return scaleup_embedding_prepared(
        x, prepare_scaleup_weight(e, compute_dtype), patch_size
    )


if __name__ == "__main__":
    # Small shapes consistent with the module's forward.
    B, L, C = 2, 16, 8               # batch, seq_len, input_dim
    out_dim, patch_size = 32, 4

    key = jax.random.PRNGKey(0)
    kx, ke = jax.random.split(key)
    x = jax.random.normal(kx, (B, L, C), dtype=jnp.float32)
    e = jax.random.normal(ke, (out_dim, C, patch_size), dtype=jnp.float32)  # like torch.randn

    # Default path: PyTorch-equivalent dtypes (f32 in, f32 out, f32 accumulation).
    out = jax.block_until_ready(scaleup_embedding(x, e, patch_size))
    assert out.shape == (B, L // patch_size, out_dim)
    assert out.dtype == x.dtype

    xp = x.reshape(B, L // patch_size, patch_size, C)
    ref = jnp.einsum("bpkc,ock->bpo", xp, e, precision=jax.lax.Precision.HIGHEST)
    assert jnp.allclose(out, ref, atol=5e-2, rtol=5e-2), float(jnp.max(jnp.abs(out - ref)))

    # Opt-in bf16 compute path (weight prepared once in bf16; x cast in-kernel).
    w_bf16 = prepare_scaleup_weight(e, jnp.bfloat16)
    out_bf16 = jax.block_until_ready(scaleup_embedding_prepared(x, w_bf16, patch_size))
    assert out_bf16.shape == (B, L // patch_size, out_dim)
    assert out_bf16.dtype == x.dtype
    assert jnp.allclose(out_bf16, ref, atol=1e-1, rtol=1e-1), float(
        jnp.max(jnp.abs(out_bf16 - ref))
    )

    print("KERNEL_OK")
</pallas_src>

<mosaic_0001>
module attributes {stable_mosaic.version = 11 : i64} {
  func.func @kernel(%arg0: i32, %arg1: memref<8x32xf32, #tpu.memory_space<vmem>>, %arg2: memref<32x32xf32, #tpu.memory_space<vmem>>, %arg3: memref<8x32xf32, #tpu.memory_space<vmem>>) attributes {dimension_semantics = [#tpu.dimension_semantics<parallel>], iteration_bounds = array<i64: 1>, scalar_prefetch = 0 : i64, scratch_operands = 0 : i64, tpu.core_type = #tpu.core_type<tc>, window_params = [{transform_indices = @transform_0, window_bounds = array<i64: 8, 32>}, {pipeline_mode = #tpu.pipeline_mode<synchronous>, transform_indices = @transform_1, window_bounds = array<i64: 32, 32>}, {transform_indices = @transform_2, window_bounds = array<i64: 8, 32>}]} {
    %c0 = arith.constant 0 : index
    %c0_0 = arith.constant 0 : index
    %0 = vector.load %arg1[%c0, %c0_0] : memref<8x32xf32, #tpu.memory_space<vmem>>, vector<8x32xf32>
    %c0_1 = arith.constant 0 : index
    %c0_2 = arith.constant 0 : index
    %1 = vector.load %arg2[%c0_1, %c0_2] : memref<32x32xf32, #tpu.memory_space<vmem>>, vector<32x32xf32>
    %cst = arith.constant dense<0.000000e+00> : vector<8x32xf32>
    %2 = tpu.matmul %0, %1, %cst {dimension_numbers = #tpu.dot_dimension_numbers<[1], [0], [0], [1], [0, 0, 1, 1], [], []>} : vector<8x32xf32>, vector<32x32xf32>, vector<8x32xf32> -> vector<8x32xf32>
    %c0_3 = arith.constant 0 : index
    %c0_4 = arith.constant 0 : index
    %3 = vector.load %arg3[%c0_3, %c0_4] : memref<8x32xf32, #tpu.memory_space<vmem>>, vector<8x32xf32>
    tpu.vector_store %arg3[%c0_3, %c0_4], %2 {strides = array<i32>} : memref<8x32xf32, #tpu.memory_space<vmem>>, vector<8x32xf32>,
    return
  }
  func.func @transform_0(%arg0: i32) -> (i32, i32) {
    %c0_i32 = arith.constant 0 : i32
    %c0_i32_0 = arith.constant 0 : i32
    return %arg0, %c0_i32 : i32, i32
  }
  func.func @transform_1(%arg0: i32) -> (i32, i32) {
    %c0_i32 = arith.constant 0 : i32
    %c0_i32_0 = arith.constant 0 : i32
    %c0_i32_1 = arith.constant 0 : i32
    return %c0_i32, %c0_i32_0 : i32, i32
  }
  func.func @transform_2(%arg0: i32) -> (i32, i32) {
    %c0_i32 = arith.constant 0 : i32
    %c0_i32_0 = arith.constant 0 : i32
    return %arg0, %c0_i32 : i32, i32
  }
}

</mosaic_0001>

<llo_original>
// kernel: scaleup_embedding_prepared.1
$region0: #{scaleup_embedding_prepared.1}
  #allocation0 [shape = 'u32[]', space=smem, size = 0x4, offset = 0x4, fixed_abs, tag = 'smem constant byte address 0x4 - core index']
  #allocation1 [shape = 'u32[144,128]{1,0:T(1,128)}', space=vmem, size = 0x12000, scoped, tag = 'internal scratch']
  %s0 = inlined_call_operand.vmem [shape: f32[8,32], index: 0, kind: input, shape index: {}]
  %s1 = inlined_call_operand.vmem [shape: f32[32,32], index: 1, kind: input, shape index: {}]
  %s2 = inlined_call_operand.hbm [shape: f32[8,32], index: 2, kind: output, shape index: {}]
  %s3 = sld [smem:[#allocation0]]
  $region18: #{scaleup_embedding_prepared.1} parent=0
    _
  %s5 = ssub.s32 1, %s3
  %s6 = scalar_select 0, %s5, %s3
  $region1: #{scaleup_embedding_prepared.1} parent=0
    #allocation2 [shape = 'u8[4096]{0}', space=vmem, size = 0x1000, scoped, tag = 'output window, operand 0, single buffered']
    #allocation3 [shape = 's32[1]{0}', space=sflag, size = 0x4, scoped, tag = 'scoped memory for scaleup_embedding_prepared.1']
    %7 = vsyncpa [#allocation3], 0
    // Predicated region
    $region2: #{scaleup_embedding_prepared.1} parent=1 // pred_check
      _
    $region3: #{scaleup_embedding_prepared.1} parent=1 // pred_check_branch
      %9 = sbr.rel (0) target = $region5
    $region4: #{scaleup_embedding_prepared.1} parent=1 // pred_region
      _
    $region5: #{scaleup_embedding_prepared.1} parent=1 // pred_fallthru
      _
    // Predicated region
    $region6: #{scaleup_embedding_prepared.1} parent=1 // pred_check
      _
    $region7: #{scaleup_embedding_prepared.1} parent=1 // pred_check_branch
      %11 = sbr.rel (0) target = $region9
    $region8: #{scaleup_embedding_prepared.1} parent=1 // pred_region
      _
    $region9: #{scaleup_embedding_prepared.1} parent=1 // pred_fallthru
      _
    %v12 = vld [vmem:[%s0] sm:$0xff]
    %v13 = vld [vmem:[%s1] sm:$0xff]
    %v14 = vld [vmem:[%s1 + $0x8] sm:$0xff]
    %v15 = vld [vmem:[%s1 + $0x10] sm:$0xff]
    %v16 = vld [vmem:[%s1 + $0x18] sm:$0xff]
    %vm17 = vcmask 261120
    %v19 = vsel %vm17, %v12, 0
    %21 = vmatprep.subr.mxu0 0.0
    %22 = vmatpush1.msra.mxu0 %v13
    %23 = vmatprep.subr.mxu0 0.0
    %24 = vmatpush1.msra.mxu0 %v14
    %25 = vmatprep.subr.mxu0 0.0
    %26 = vmatpush1.msra.mxu0 %v15
    %27 = vmatprep.subr.mxu0 0.0
    %28 = vmatpush1.msra.mxu0 %v16
    %29 = vmatprep.subr.mxu0 0.0
    %30 = vmatpush1.msra.mxu0 0.0
    %31 = vmatprep.subr.mxu0 0.0
    %32 = vmatpush1.msra.mxu0 0.0
    %33 = vmatprep.subr.mxu0 0.0
    %34 = vmatpush1.msra.mxu0 0.0
    %35 = vmatprep.subr.mxu0 0.0
    %36 = vmatpush1.msra.mxu0 0.0
    %37 = vmatprep.subr.mxu0 0.0
    %38 = vmatpush1.msra.mxu0 0.0
    %39 = vmatprep.subr.mxu0 0.0
    %40 = vmatpush1.msra.mxu0 0.0
    %41 = vmatprep.subr.mxu0 0.0
    %42 = vmatpush1.msra.mxu0 0.0
    %43 = vmatprep.subr.mxu0 0.0
    %44 = vmatpush1.msra.mxu0 0.0
    %45 = vmatprep.subr.mxu0 0.0
    %46 = vmatpush1.msra.mxu0 0.0
    %47 = vmatprep.subr.mxu0 0.0
    %48 = vmatpush1.msra.mxu0 0.0
    %49 = vmatprep.subr.mxu0 0.0
    %50 = vmatpush1.msra.mxu0 0.0
    %51 = vmatprep.subr.mxu0 0.0
    %52 = vmatpush1.msra.mxu0 0.0
    %53 = vmatprep.subr.mxu0 0.0
    %54 = vmatpush1.msra.mxu0 0.0
    %55 = vmatprep.subr.mxu0 0.0
    %56 = vmatpush1.msra.mxu0 0.0
    %57 = vmatprep.subr.mxu0 0.0
    %58 = vmatpush1.msra.mxu0 0.0
    %59 = vmatprep.subr.mxu0 0.0
    %60 = vmatpush1.msra.mxu0 0.0
    %61 = vmatprep.subr.mxu0 0.0
    %62 = vmatpush1.msra.mxu0 0.0
    %63 = vmatprep.subr.mxu0 0.0
    %64 = vmatpush1.msra.mxu0 0.0
    %65 = vmatprep.subr.mxu0 0.0
    %66 = vmatpush1.msra.mxu0 0.0
    %67 = vmatprep.subr.mxu0 0.0
    %68 = vmatpush1.msra.mxu0 0.0
    %69 = vmatprep.subr.mxu0 0.0
    %70 = vmatpush1.msra.mxu0 0.0
    %71 = vmatprep.subr.mxu0 0.0
    %72 = vmatpush1.msra.mxu0 0.0
    %73 = vmatprep.subr.mxu0 0.0
    %74 = vmatpush1.msra.mxu0 0.0
    %75 = vmatprep.subr.mxu0 0.0
    %76 = vmatpush1.msra.mxu0 0.0
    %77 = vmatprep.subr.mxu0 0.0
    %78 = vmatpush1.msra.mxu0 0.0
    %79 = vmatprep.subr.mxu0 0.0
    %80 = vmatpush1.msra.mxu0 0.0
    %81 = vmatprep.subr.mxu0 0.0
    %82 = vmatpush1.msra.mxu0 0.0
    %83 = vmatprep.subr.mxu0 0.0
    %84 = vmatpush1.msra.mxu0 0.0
    %85 = vmatprep.mubr.f32.mxu0 0.0
    %86 = vmatmul.mubr.f32.gmra.mrb[0].mxu0 %v19
    %v87 = vpop.f32.mrb[0].mxu0
    %v88 = vadd.f32 0.0, %v87
    %v89 = vpop.f32.mrb[0].mxu0
    %90 = vdwg.mxu0
    %91 = vst.msk [vmem:[#allocation2] sm:$0xff] %vm17, %v88
    // Predicated region
    $region10: #{scaleup_embedding_prepared.1} parent=1 // pred_check
      _
    $region11: #{scaleup_embedding_prepared.1} parent=1 // pred_check_branch
      %93 = sbr.rel (0) target = $region13
    $region12: #{scaleup_embedding_prepared.1} parent=1 // pred_region
      %s95 = ssub.s32 128, 128
      %96 = vsyncadd [#allocation3], %s95
      %s98 = sshll.u32 [#allocation2], 4
      %s99 = int_to_ptr.vmem [resolvable:$true] %s98
      %101 = dma.vmem_to_hbm [thread:$0]  %s99, 128, %s2, [#allocation3]
    $region13: #{scaleup_embedding_prepared.1} parent=1 // pred_fallthru
      _
    // Predicated region
    $region14: #{scaleup_embedding_prepared.1} parent=1 // pred_check
      _
    $region15: #{scaleup_embedding_prepared.1} parent=1 // pred_check_branch
      %103 = sbr.rel (0) target = $region17
    $region16: #{scaleup_embedding_prepared.1} parent=1 // pred_region
      %104 = dma.done [#allocation3], 128
    $region17: #{scaleup_embedding_prepared.1} parent=1 // pred_fallthru
      _
    %105 = vsyncpa [#allocation3], 1

</llo_original>
